<compile_context>
chip_gen: v6e
topology: v6e:2x2x1
jax: 0.10.0
libtpu: 0.0.40
codegen_flags: <defaults>
</compile_context>

<pallas_src>
import jax
import jax.numpy as jnp
from jax.experimental import pallas as pl
from jax.experimental.pallas import tpu as pltpu
from jax.scipy.linalg import block_diag

# ----------------------------- configuration --------------------------------
SIZE_SPLITS = (64, 64)                  # equal splits (required by strided slicing)
N_SPLITS = len(SIZE_SPLITS)
SIZE_IN = sum(SIZE_SPLITS)              # 128  -> lane-dense feature / output axis
N_BLOCKS = 3                            # ResnetBlockFC blocks per split
BATCH = 2                               # B
N_PTS = 32                              # N (points per batch element)
ROW_TILE_MAX = 512                      # rows per grid step (multiple of 8)


def _round_up(a, m):
    return (a + m - 1) // m * m


# ------------------------------- kernel --------------------------------------
def decoder_mlp_kernel(x_ref, w0_ref, b0_ref, w1_ref, b1_ref, out_ref):
    # x_ref: (R, SIZE_IN)          row tile, features already split-ordered
    # w0_ref/w1_ref: (N_BLOCKS, SIZE_IN, SIZE_IN)  block-diagonal fused weights
    # b0_ref/b1_ref: (N_BLOCKS, 1, SIZE_IN)
    x = x_ref[...]
    for blk in range(N_BLOCKS):                     # small, fully unrolled
        net = jnp.dot(jnp.maximum(x, 0.0), w0_ref[blk],
                      preferred_element_type=jnp.float32) + b0_ref[blk]
        dx = jnp.dot(jnp.maximum(net, 0.0), w1_ref[blk],
                     preferred_element_type=jnp.float32) + b1_ref[blk]
        x = x + dx                                  # residual (no shortcut)
    out_ref[...] = x


# ------------------------------- wrapper --------------------------------------
def decoder_mlp(x, params):
    B, N, size_in = x.shape
    assert size_in == SIZE_IN and len(set(SIZE_SPLITS)) == 1

    # De-interleave columns (x[:, :, i::n_splits]) and lay splits out
    # contiguously -- this is exactly the order of the final torch.cat, so the
    # kernel output needs no re-permutation.
    x_re = jnp.concatenate([x[:, :, i::N_SPLITS] for i in range(N_SPLITS)], axis=-1)
    x2d = x_re.reshape(B * N, SIZE_IN)

    # Fuse per-split weights of each block depth into block-diagonal matrices.
    w0f = jnp.stack([block_diag(*[params["w0"][i][j] for i in range(N_SPLITS)])
                     for j in range(N_BLOCKS)])                      # (nb, D, D)
    w1f = jnp.stack([block_diag(*[params["w1"][i][j] for i in range(N_SPLITS)])
                     for j in range(N_BLOCKS)])                      # (nb, D, D)
    b0f = jnp.stack([jnp.concatenate([params["b0"][i][j] for i in range(N_SPLITS)])[None, :]
                     for j in range(N_BLOCKS)])                      # (nb, 1, D)
    b1f = jnp.stack([jnp.concatenate([params["b1"][i][j] for i in range(N_SPLITS)])[None, :]
                     for j in range(N_BLOCKS)])                      # (nb, 1, D)

    # Row tiling: big row blocks per grid step, padded to a multiple of the tile.
    rows = x2d.shape[0]
    R = min(ROW_TILE_MAX, _round_up(rows, 8))
    rows_p = _round_up(rows, R)
    if rows_p != rows:
        x2d = jnp.pad(x2d, ((0, rows_p - rows), (0, 0)))

    def full_spec(shape):
        nd = len(shape)
        return pl.BlockSpec(shape, lambda i, _nd=nd: (0,) * _nd)

    flops = 2 * rows_p * N_BLOCKS * 2 * SIZE_IN * SIZE_IN
    bytes_accessed = (2 * rows_p * SIZE_IN + 2 * N_BLOCKS * SIZE_IN * SIZE_IN
                      + 2 * N_BLOCKS * SIZE_IN) * 4

    out = pl.pallas_call(
        decoder_mlp_kernel,
        out_shape=jax.ShapeDtypeStruct((rows_p, SIZE_IN), jnp.float32),
        grid=(rows_p // R,),
        in_specs=[pl.BlockSpec((R, SIZE_IN), lambda i: (i, 0)),
                  full_spec(w0f.shape), full_spec(b0f.shape),
                  full_spec(w1f.shape), full_spec(b1f.shape)],
        out_specs=pl.BlockSpec((R, SIZE_IN), lambda i: (i, 0)),
        compiler_params=pltpu.CompilerParams(dimension_semantics=("parallel",)),
        cost_estimate=pl.CostEstimate(flops=flops, transcendentals=0,
                                      bytes_accessed=bytes_accessed),
    )(x2d, w0f, b0f, w1f, b1f)

    return out[:rows].reshape(B, N, SIZE_IN)


# --------------------------- plain-JAX reference ------------------------------
def reference(x, params):
    B, N, size_in = x.shape
    outs = []
    for i in range(N_SPLITS):
        sx = x[:, :, i:size_in:N_SPLITS]
        for j in range(N_BLOCKS):
            w0, b0 = params["w0"][i][j], params["b0"][i][j]
            w1, b1 = params["w1"][i][j], params["b1"][i][j]
            net = jnp.maximum(sx, 0.0) @ w0 + b0
            dx = jnp.maximum(net, 0.0) @ w1 + b1
            sx = sx + dx
        outs.append(sx)
    return jnp.concatenate(outs, axis=-1)


# ------------------------------- params ---------------------------------------
def make_params(key):
    # Random (non-zero) weights: forward semantics don't depend on the module's
    # init (fc_1 is zero-init in PyTorch, which would make blocks identity).
    params = {"w0": [], "b0": [], "w1": [], "b1": []}
    for s in SIZE_SPLITS:
        w0s, b0s, w1s, b1s = [], [], [], []
        for _ in range(N_BLOCKS):
            key, k1, k2, k3, k4 = jax.random.split(key, 5)
            w0s.append(jax.random.normal(k1, (s, s), jnp.float32) * (2.0 / s) ** 0.5)
            b0s.append(jax.random.normal(k2, (s,), jnp.float32) * 0.1)
            w1s.append(jax.random.normal(k3, (s, s), jnp.float32) * 0.1 * (2.0 / s) ** 0.5)
            b1s.append(jax.random.normal(k4, (s,), jnp.float32) * 0.1)
        params["w0"].append(w0s)
        params["b0"].append(b0s)
        params["w1"].append(w1s)
        params["b1"].append(b1s)
    return params


# ------------------------------- main -----------------------------------------
if __name__ == "__main__":
    key = jax.random.PRNGKey(0)
    k_params, k_x = jax.random.split(key)
    params = make_params(k_params)
    x = jax.random.normal(k_x, (BATCH, N_PTS, SIZE_IN), jnp.float32)

    out = decoder_mlp(x, params)
    out = jax.block_until_ready(out)

    ref = reference(x, params)
    assert out.shape == (BATCH, N_PTS, SIZE_IN)
    assert jnp.allclose(out, ref, atol=1e-4, rtol=1e-4), (
        f"max abs diff {jnp.max(jnp.abs(out - ref))}"
    )
    print("KERNEL_OK")
</pallas_src>

<mosaic_0001>
module attributes {stable_mosaic.version = 11 : i64} {
  func.func @decoder_mlp_kernel(%arg0: i32, %arg1: memref<64x128xf32, #tpu.memory_space<vmem>>, %arg2: memref<3x128x128xf32, #tpu.memory_space<vmem>>, %arg3: memref<3x1x128xf32, #tpu.memory_space<vmem>>, %arg4: memref<3x128x128xf32, #tpu.memory_space<vmem>>, %arg5: memref<3x1x128xf32, #tpu.memory_space<vmem>>, %arg6: memref<64x128xf32, #tpu.memory_space<vmem>>) attributes {dimension_semantics = [#tpu.dimension_semantics<parallel>], iteration_bounds = array<i64: 1>, scalar_prefetch = 0 : i64, scratch_operands = 0 : i64, tpu.core_type = #tpu.core_type<tc>, window_params = [{transform_indices = @transform_0, window_bounds = array<i64: 64, 128>}, {pipeline_mode = #tpu.pipeline_mode<synchronous>, transform_indices = @transform_1, window_bounds = array<i64: 3, 128, 128>}, {pipeline_mode = #tpu.pipeline_mode<synchronous>, transform_indices = @transform_2, window_bounds = array<i64: 3, 1, 128>}, {pipeline_mode = #tpu.pipeline_mode<synchronous>, transform_indices = @transform_3, window_bounds = array<i64: 3, 128, 128>}, {pipeline_mode = #tpu.pipeline_mode<synchronous>, transform_indices = @transform_4, window_bounds = array<i64: 3, 1, 128>}, {transform_indices = @transform_5, window_bounds = array<i64: 64, 128>}]} {
    %c0 = arith.constant 0 : index
    %c0_0 = arith.constant 0 : index
    %0 = vector.load %arg1[%c0, %c0_0] : memref<64x128xf32, #tpu.memory_space<vmem>>, vector<64x128xf32>
    %cst = arith.constant 0.000000e+00 : f32
    %1 = vector.broadcast %cst : f32 to vector<64x128xf32>
    %2 = arith.maximumf %0, %1 : vector<64x128xf32>
    %c0_1 = arith.constant 0 : index
    %c0_2 = arith.constant 0 : index
    %c0_3 = arith.constant 0 : index
    %3 = vector.load %arg2[%c0_1, %c0_2, %c0_3] : memref<3x128x128xf32, #tpu.memory_space<vmem>>, vector<1x128x128xf32>
    %4 = vector.shape_cast %3 : vector<1x128x128xf32> to vector<128x128xf32>
    %cst_4 = arith.constant dense<0.000000e+00> : vector<64x128xf32>
    %5 = tpu.matmul %2, %4, %cst_4 {dimension_numbers = #tpu.dot_dimension_numbers<[1], [0], [0], [1], [0, 0, 1, 1], [], []>} : vector<64x128xf32>, vector<128x128xf32>, vector<64x128xf32> -> vector<64x128xf32>
    %c0_5 = arith.constant 0 : index
    %c0_6 = arith.constant 0 : index
    %c0_7 = arith.constant 0 : index
    %6 = vector.load %arg3[%c0_5, %c0_6, %c0_7] : memref<3x1x128xf32, #tpu.memory_space<vmem>>, vector<1x1x128xf32>
    %7 = vector.shape_cast %6 : vector<1x1x128xf32> to vector<1x128xf32>
    %8 = vector.broadcast %7 : vector<1x128xf32> to vector<64x128xf32>
    %9 = arith.addf %5, %8 : vector<64x128xf32>
    %cst_8 = arith.constant 0.000000e+00 : f32
    %10 = vector.broadcast %cst_8 : f32 to vector<64x128xf32>
    %11 = arith.maximumf %9, %10 : vector<64x128xf32>
    %c0_9 = arith.constant 0 : index
    %c0_10 = arith.constant 0 : index
    %c0_11 = arith.constant 0 : index
    %12 = vector.load %arg4[%c0_9, %c0_10, %c0_11] : memref<3x128x128xf32, #tpu.memory_space<vmem>>, vector<1x128x128xf32>
    %13 = vector.shape_cast %12 : vector<1x128x128xf32> to vector<128x128xf32>
    %cst_12 = arith.constant dense<0.000000e+00> : vector<64x128xf32>
    %14 = tpu.matmul %11, %13, %cst_12 {dimension_numbers = #tpu.dot_dimension_numbers<[1], [0], [0], [1], [0, 0, 1, 1], [], []>} : vector<64x128xf32>, vector<128x128xf32>, vector<64x128xf32> -> vector<64x128xf32>
    %c0_13 = arith.constant 0 : index
    %c0_14 = arith.constant 0 : index
    %c0_15 = arith.constant 0 : index
    %15 = vector.load %arg5[%c0_13, %c0_14, %c0_15] : memref<3x1x128xf32, #tpu.memory_space<vmem>>, vector<1x1x128xf32>
    %16 = vector.shape_cast %15 : vector<1x1x128xf32> to vector<1x128xf32>
    %17 = vector.broadcast %16 : vector<1x128xf32> to vector<64x128xf32>
    %18 = arith.addf %14, %17 : vector<64x128xf32>
    %19 = arith.addf %0, %18 : vector<64x128xf32>
    %cst_16 = arith.constant 0.000000e+00 : f32
    %20 = vector.broadcast %cst_16 : f32 to vector<64x128xf32>
    %21 = arith.maximumf %19, %20 : vector<64x128xf32>
    %c1 = arith.constant 1 : index
    %c0_17 = arith.constant 0 : index
    %c0_18 = arith.constant 0 : index
    %22 = vector.load %arg2[%c1, %c0_17, %c0_18] : memref<3x128x128xf32, #tpu.memory_space<vmem>>, vector<1x128x128xf32>
    %23 = vector.shape_cast %22 : vector<1x128x128xf32> to vector<128x128xf32>
    %cst_19 = arith.constant dense<0.000000e+00> : vector<64x128xf32>
    %24 = tpu.matmul %21, %23, %cst_19 {dimension_numbers = #tpu.dot_dimension_numbers<[1], [0], [0], [1], [0, 0, 1, 1], [], []>} : vector<64x128xf32>, vector<128x128xf32>, vector<64x128xf32> -> vector<64x128xf32>
    %c1_20 = arith.constant 1 : index
    %c0_21 = arith.constant 0 : index
    %c0_22 = arith.constant 0 : index
    %25 = vector.load %arg3[%c1_20, %c0_21, %c0_22] : memref<3x1x128xf32, #tpu.memory_space<vmem>>, vector<1x1x128xf32>
    %26 = vector.shape_cast %25 : vector<1x1x128xf32> to vector<1x128xf32>
    %27 = vector.broadcast %26 : vector<1x128xf32> to vector<64x128xf32>
    %28 = arith.addf %24, %27 : vector<64x128xf32>
    %cst_23 = arith.constant 0.000000e+00 : f32
    %29 = vector.broadcast %cst_23 : f32 to vector<64x128xf32>
    %30 = arith.maximumf %28, %29 : vector<64x128xf32>
    %c1_24 = arith.constant 1 : index
    %c0_25 = arith.constant 0 : index
    %c0_26 = arith.constant 0 : index
    %31 = vector.load %arg4[%c1_24, %c0_25, %c0_26] : memref<3x128x128xf32, #tpu.memory_space<vmem>>, vector<1x128x128xf32>
    %32 = vector.shape_cast %31 : vector<1x128x128xf32> to vector<128x128xf32>
    %cst_27 = arith.constant dense<0.000000e+00> : vector<64x128xf32>
    %33 = tpu.matmul %30, %32, %cst_27 {dimension_numbers = #tpu.dot_dimension_numbers<[1], [0], [0], [1], [0, 0, 1, 1], [], []>} : vector<64x128xf32>, vector<128x128xf32>, vector<64x128xf32> -> vector<64x128xf32>
    %c1_28 = arith.constant 1 : index
    %c0_29 = arith.constant 0 : index
    %c0_30 = arith.constant 0 : index
    %34 = vector.load %arg5[%c1_28, %c0_29, %c0_30] : memref<3x1x128xf32, #tpu.memory_space<vmem>>, vector<1x1x128xf32>
    %35 = vector.shape_cast %34 : vector<1x1x128xf32> to vector<1x128xf32>
    %36 = vector.broadcast %35 : vector<1x128xf32> to vector<64x128xf32>
    %37 = arith.addf %33, %36 : vector<64x128xf32>
    %38 = arith.addf %19, %37 : vector<64x128xf32>
    %cst_31 = arith.constant 0.000000e+00 : f32
    %39 = vector.broadcast %cst_31 : f32 to vector<64x128xf32>
    %40 = arith.maximumf %38, %39 : vector<64x128xf32>
    %c2 = arith.constant 2 : index
    %c0_32 = arith.constant 0 : index
    %c0_33 = arith.constant 0 : index
    %41 = vector.load %arg2[%c2, %c0_32, %c0_33] : memref<3x128x128xf32, #tpu.memory_space<vmem>>, vector<1x128x128xf32>
    %42 = vector.shape_cast %41 : vector<1x128x128xf32> to vector<128x128xf32>
    %cst_34 = arith.constant dense<0.000000e+00> : vector<64x128xf32>
    %43 = tpu.matmul %40, %42, %cst_34 {dimension_numbers = #tpu.dot_dimension_numbers<[1], [0], [0], [1], [0, 0, 1, 1], [], []>} : vector<64x128xf32>, vector<128x128xf32>, vector<64x128xf32> -> vector<64x128xf32>
    %c2_35 = arith.constant 2 : index
    %c0_36 = arith.constant 0 : index
    %c0_37 = arith.constant 0 : index
    %44 = vector.load %arg3[%c2_35, %c0_36, %c0_37] : memref<3x1x128xf32, #tpu.memory_space<vmem>>, vector<1x1x128xf32>
    %45 = vector.shape_cast %44 : vector<1x1x128xf32> to vector<1x128xf32>
    %46 = vector.broadcast %45 : vector<1x128xf32> to vector<64x128xf32>
    %47 = arith.addf %43, %46 : vector<64x128xf32>
    %cst_38 = arith.constant 0.000000e+00 : f32
    %48 = vector.broadcast %cst_38 : f32 to vector<64x128xf32>
    %49 = arith.maximumf %47, %48 : vector<64x128xf32>
    %c2_39 = arith.constant 2 : index
    %c0_40 = arith.constant 0 : index
    %c0_41 = arith.constant 0 : index
    %50 = vector.load %arg4[%c2_39, %c0_40, %c0_41] : memref<3x128x128xf32, #tpu.memory_space<vmem>>, vector<1x128x128xf32>
    %51 = vector.shape_cast %50 : vector<1x128x128xf32> to vector<128x128xf32>
    %cst_42 = arith.constant dense<0.000000e+00> : vector<64x128xf32>
    %52 = tpu.matmul %49, %51, %cst_42 {dimension_numbers = #tpu.dot_dimension_numbers<[1], [0], [0], [1], [0, 0, 1, 1], [], []>} : vector<64x128xf32>, vector<128x128xf32>, vector<64x128xf32> -> vector<64x128xf32>
    %c2_43 = arith.constant 2 : index
    %c0_44 = arith.constant 0 : index
    %c0_45 = arith.constant 0 : index
    %53 = vector.load %arg5[%c2_43, %c0_44, %c0_45] : memref<3x1x128xf32, #tpu.memory_space<vmem>>, vector<1x1x128xf32>
    %54 = vector.shape_cast %53 : vector<1x1x128xf32> to vector<1x128xf32>
    %55 = vector.broadcast %54 : vector<1x128xf32> to vector<64x128xf32>
    %56 = arith.addf %52, %55 : vector<64x128xf32>
    %57 = arith.addf %38, %56 : vector<64x128xf32>
    %c0_46 = arith.constant 0 : index
    %c0_47 = arith.constant 0 : index
    %58 = vector.load %arg6[%c0_46, %c0_47] : memref<64x128xf32, #tpu.memory_space<vmem>>, vector<64x128xf32>
    tpu.vector_store %arg6[%c0_46, %c0_47], %57 {strides = array<i32>} : memref<64x128xf32, #tpu.memory_space<vmem>>, vector<64x128xf32>,
    return
  }
  func.func @transform_0(%arg0: i32) -> (i32, i32) {
    %c0_i32 = arith.constant 0 : i32
    %c0_i32_0 = arith.constant 0 : i32
    return %arg0, %c0_i32 : i32, i32
  }
  func.func @transform_1(%arg0: i32) -> (i32, i32, i32) {
    %c0_i32 = arith.constant 0 : i32
    %c0_i32_0 = arith.constant 0 : i32
    %c0_i32_1 = arith.constant 0 : i32
    %c0_i32_2 = arith.constant 0 : i32
    return %c0_i32, %c0_i32_0, %c0_i32_1 : i32, i32, i32
  }
  func.func @transform_2(%arg0: i32) -> (i32, i32, i32) {
    %c0_i32 = arith.constant 0 : i32
    %c0_i32_0 = arith.constant 0 : i32
    %c0_i32_1 = arith.constant 0 : i32
    %c0_i32_2 = arith.constant 0 : i32
    return %c0_i32, %c0_i32_0, %c0_i32_1 : i32, i32, i32
  }
  func.func @transform_3(%arg0: i32) -> (i32, i32, i32) {
    %c0_i32 = arith.constant 0 : i32
    %c0_i32_0 = arith.constant 0 : i32
    %c0_i32_1 = arith.constant 0 : i32
    %c0_i32_2 = arith.constant 0 : i32
    return %c0_i32, %c0_i32_0, %c0_i32_1 : i32, i32, i32
  }
  func.func @transform_4(%arg0: i32) -> (i32, i32, i32) {
    %c0_i32 = arith.constant 0 : i32
    %c0_i32_0 = arith.constant 0 : i32
    %c0_i32_1 = arith.constant 0 : i32
    %c0_i32_2 = arith.constant 0 : i32
    return %c0_i32, %c0_i32_0, %c0_i32_1 : i32, i32, i32
  }
  func.func @transform_5(%arg0: i32) -> (i32, i32) {
    %c0_i32 = arith.constant 0 : i32
    %c0_i32_0 = arith.constant 0 : i32
    return %arg0, %c0_i32 : i32, i32
  }
}

</mosaic_0001>

<llo_original>
// kernel: tpu_custom_call.1
$region0: #{tpu_custom_call.1}
  #allocation0 [shape = 'u32[]', space=smem, size = 0x4, offset = 0x4, fixed_abs, tag = 'smem constant byte address 0x4 - core index']
  #allocation1 [shape = 'u32[144,128]{1,0:T(1,128)}', space=vmem, size = 0x12000, scoped, tag = 'internal scratch']
  %s0 = inlined_call_operand.hbm [shape: f32[64,128], index: 0, kind: input, shape index: {}]
  %s1 = inlined_call_operand.hbm [shape: f32[3,128,128], index: 1, kind: input, shape index: {}]
  %s2 = inlined_call_operand.vmem [shape: f32[3,1,128], index: 2, kind: input, shape index: {}]
  %s3 = inlined_call_operand.hbm [shape: f32[3,128,128], index: 3, kind: input, shape index: {}]
  %s4 = inlined_call_operand.vmem [shape: f32[3,1,128], index: 4, kind: input, shape index: {}]
  %s5 = inlined_call_operand.hbm [shape: f32[64,128], index: 5, kind: output, shape index: {}]
  %s6 = sld [smem:[#allocation0]]
  $region42: #{tpu_custom_call.1} parent=0
    _
  %s8 = ssub.s32 1, %s6
  %s9 = scalar_select 0, %s8, %s6
  $region1: #{tpu_custom_call.1} parent=0
    #allocation2 [shape = 'u8[32768]{0}', space=vmem, size = 0x8000, scoped, tag = 'input window, operand 0, single buffered']
    #allocation3 [shape = 's32[1]{0}', space=sflag, size = 0x4, scoped, tag = 'scoped memory for tpu_custom_call.1']
    #allocation4 [shape = 's32[1]{0}', space=sflag, size = 0x4, scoped, tag = 'scoped memory for tpu_custom_call.1']
    #allocation5 [shape = 'u8[196608]{0}', space=vmem, size = 0x30000, scoped, tag = 'input window, operand 1, single buffered']
    #allocation6 [shape = 's32[1]{0}', space=sflag, size = 0x4, scoped, tag = 'scoped memory for tpu_custom_call.1']
    #allocation7 [shape = 'u8[196608]{0}', space=vmem, size = 0x30000, scoped, tag = 'input window, operand 3, single buffered']
    #allocation8 [shape = 'u8[32768]{0}', space=vmem, size = 0x8000, scoped, tag = 'output window, operand 0, single buffered']
    %10 = vsyncpa [#allocation3], 0
    %11 = vsyncpa [#allocation6], 0
    %12 = vsyncpa [#allocation4], 0
    // Predicated region
    $region2: #{tpu_custom_call.1} parent=1 // pred_check
      _
    $region3: #{tpu_custom_call.1} parent=1 // pred_check_branch
      %14 = sbr.rel (0) target = $region5
    $region4: #{tpu_custom_call.1} parent=1 // pred_region
      %s16 = ssub.s32 1024, 1024
      %17 = vsyncadd [#allocation3], %s16
      %s18 = sshll.u32 [#allocation2], 4
      %s19 = int_to_ptr.vmem [resolvable:$true] %s18
      %24 = dma.hbm_to_vmem [thread:$0]  %s0, 1024, %s19, [#allocation3], 128, 128, 8
    $region5: #{tpu_custom_call.1} parent=1 // pred_fallthru
      _
    // Predicated region
    $region6: #{tpu_custom_call.1} parent=1 // pred_check
      _
    $region7: #{tpu_custom_call.1} parent=1 // pred_check_branch
      %26 = sbr.rel (0) target = $region9
    $region8: #{tpu_custom_call.1} parent=1 // pred_region
      %s28 = ssub.s32 6144, 6144
      %29 = vsyncadd [#allocation6], %s28
      %s30 = sshll.u32 [#allocation5], 4
      %s31 = int_to_ptr.vmem [resolvable:$true] %s30
      %36 = dma.hbm_to_vmem [thread:$0]  %s1, 6144, %s31, [#allocation6], 128, 128, 8
    $region9: #{tpu_custom_call.1} parent=1 // pred_fallthru
      _
    // Predicated region
    $region10: #{tpu_custom_call.1} parent=1 // pred_check
      _
    $region11: #{tpu_custom_call.1} parent=1 // pred_check_branch
      %38 = sbr.rel (0) target = $region13
    $region12: #{tpu_custom_call.1} parent=1 // pred_region
      _
    $region13: #{tpu_custom_call.1} parent=1 // pred_fallthru
      _
    // Predicated region
    $region14: #{tpu_custom_call.1} parent=1 // pred_check
      _
    $region15: #{tpu_custom_call.1} parent=1 // pred_check_branch
      %40 = sbr.rel (0) target = $region17
    $region16: #{tpu_custom_call.1} parent=1 // pred_region
      %s42 = ssub.s32 6144, 6144
      %43 = vsyncadd [#allocation6], %s42
      %s44 = sshll.u32 [#allocation7], 4
      %s45 = int_to_ptr.vmem [resolvable:$true] %s44
      %50 = dma.hbm_to_vmem [thread:$0]  %s3, 6144, %s45, [#allocation6], 128, 128, 8
    $region17: #{tpu_custom_call.1} parent=1 // pred_fallthru
      _
    // Predicated region
    $region18: #{tpu_custom_call.1} parent=1 // pred_check
      _
    $region19: #{tpu_custom_call.1} parent=1 // pred_check_branch
      %52 = sbr.rel (0) target = $region21
    $region20: #{tpu_custom_call.1} parent=1 // pred_region
      _
    $region21: #{tpu_custom_call.1} parent=1 // pred_fallthru
      _
    // Predicated region
    $region22: #{tpu_custom_call.1} parent=1 // pred_check
      _
    $region23: #{tpu_custom_call.1} parent=1 // pred_check_branch
      %54 = sbr.rel (0) target = $region25
    $region24: #{tpu_custom_call.1} parent=1 // pred_region
      %55 = dma.done [#allocation3], 1024
    $region25: #{tpu_custom_call.1} parent=1 // pred_fallthru
      _
    // Predicated region
    $region26: #{tpu_custom_call.1} parent=1 // pred_check
      _
    $region27: #{tpu_custom_call.1} parent=1 // pred_check_branch
      %57 = sbr.rel (0) target = $region29
    $region28: #{tpu_custom_call.1} parent=1 // pred_region
      %58 = dma.done [#allocation6], 6144
    $region29: #{tpu_custom_call.1} parent=1 // pred_fallthru
      _
    // Predicated region
    $region30: #{tpu_custom_call.1} parent=1 // pred_check
      _
    $region31: #{tpu_custom_call.1} parent=1 // pred_check_branch
      %60 = sbr.rel (0) target = $region33
    $region32: #{tpu_custom_call.1} parent=1 // pred_region
      %61 = dma.done [#allocation6], 6144
    $region33: #{tpu_custom_call.1} parent=1 // pred_fallthru
      _
    %v62 = vld [vmem:[#allocation2] sm:$0xff]
    %v63 = vld [vmem:[#allocation2 + $0x8] sm:$0xff]
    %v64 = vld [vmem:[#allocation2 + $0x10] sm:$0xff]
    %v65 = vld [vmem:[#allocation2 + $0x18] sm:$0xff]
    %v66 = vld [vmem:[#allocation2 + $0x20] sm:$0xff]
    %v67 = vld [vmem:[#allocation2 + $0x28] sm:$0xff]
    %v68 = vld [vmem:[#allocation2 + $0x30] sm:$0xff]
    %v69 = vld [vmem:[#allocation2 + $0x38] sm:$0xff]
    %v70 = vmax.f32 %v62, 0.0
    %v71 = vmax.f32 %v63, 0.0
    %v72 = vmax.f32 %v64, 0.0
    %v73 = vmax.f32 %v65, 0.0
    %v74 = vmax.f32 %v66, 0.0
    %v75 = vmax.f32 %v67, 0.0
    %v76 = vmax.f32 %v68, 0.0
    %v77 = vmax.f32 %v69, 0.0
    %v78 = vld [vmem:[#allocation5] sm:$0xff]
    %v79 = vld [vmem:[#allocation5 + $0x8] sm:$0xff]
    %v80 = vld [vmem:[#allocation5 + $0x10] sm:$0xff]
    %v81 = vld [vmem:[#allocation5 + $0x18] sm:$0xff]
    %v82 = vld [vmem:[#allocation5 + $0x20] sm:$0xff]
    %v83 = vld [vmem:[#allocation5 + $0x28] sm:$0xff]
    %v84 = vld [vmem:[#allocation5 + $0x30] sm:$0xff]
    %v85 = vld [vmem:[#allocation5 + $0x38] sm:$0xff]
    %v86 = vld [vmem:[#allocation5 + $0x40] sm:$0xff]
    %v87 = vld [vmem:[#allocation5 + $0x48] sm:$0xff]
    %v88 = vld [vmem:[#allocation5 + $0x50] sm:$0xff]
    %v89 = vld [vmem:[#allocation5 + $0x58] sm:$0xff]
    %v90 = vld [vmem:[#allocation5 + $0x60] sm:$0xff]
    %v91 = vld [vmem:[#allocation5 + $0x68] sm:$0xff]
    %v92 = vld [vmem:[#allocation5 + $0x70] sm:$0xff]
    %v93 = vld [vmem:[#allocation5 + $0x78] sm:$0xff]
    %v94 = vld [vmem:[%s2] sm:$0x1]
    %v96 = vlaneseq
    %v97 = vshrl.u32 %v96, 7
    %v98 = vsub.s32 0, %v97
    %v99 = vrot.slane %v94, %v98
    %101 = vmatprep.subr.mxu0 0.0
    %102 = vmatpush1.msra.mxu0 %v93
    %103 = vmatprep.subr.mxu0 0.0
    %104 = vmatpush1.msra.mxu0 %v92
    %105 = vmatprep.subr.mxu0 0.0
    %106 = vmatpush1.msra.mxu0 %v91
    %107 = vmatprep.subr.mxu0 0.0
    %108 = vmatpush1.msra.mxu0 %v90
    %109 = vmatprep.subr.mxu0 0.0
    %110 = vmatpush1.msra.mxu0 %v89
    %111 = vmatprep.subr.mxu0 0.0
    %112 = vmatpush1.msra.mxu0 %v88
    %113 = vmatprep.subr.mxu0 0.0
    %114 = vmatpush1.msra.mxu0 %v87
    %115 = vmatprep.subr.mxu0 0.0
    %116 = vmatpush1.msra.mxu0 %v86
    %117 = vmatprep.subr.mxu0 0.0
    %118 = vmatpush1.msra.mxu0 %v85
    %119 = vmatprep.subr.mxu0 0.0
    %120 = vmatpush1.msra.mxu0 %v84
    %121 = vmatprep.subr.mxu0 0.0
    %122 = vmatpush1.msra.mxu0 %v83
    %123 = vmatprep.subr.mxu0 0.0
    %124 = vmatpush1.msra.mxu0 %v82
    %125 = vmatprep.subr.mxu0 0.0
    %126 = vmatpush1.msra.mxu0 %v81
    %127 = vmatprep.subr.mxu0 0.0
    %128 = vmatpush1.msra.mxu0 %v80
    %129 = vmatprep.subr.mxu0 0.0
    %130 = vmatpush1.msra.mxu0 %v79
    %131 = vmatprep.subr.mxu0 0.0
    %132 = vmatpush1.msra.mxu0 %v78
    %133 = vmatprep.subr.mxu0 0.0
    %134 = vmatpush2.msra.mxu0 0.0
    %135 = vmatprep.subr.mxu0 0.0
    %136 = vmatpush2.msra.mxu0 0.0
    %137 = vmatprep.subr.mxu0 0.0
    %138 = vmatpush2.msra.mxu0 0.0
    %139 = vmatprep.subr.mxu0 0.0
    %140 = vmatpush2.msra.mxu0 0.0
    %141 = vmatprep.subr.mxu0 0.0
    %142 = vmatpush2.msra.mxu0 0.0
    %143 = vmatprep.subr.mxu0 0.0
    %144 = vmatpush2.msra.mxu0 0.0
    %145 = vmatprep.subr.mxu0 0.0
    %146 = vmatpush2.msra.mxu0 0.0
    %147 = vmatprep.subr.mxu0 0.0
    %148 = vmatpush2.msra.mxu0 0.0
    %149 = vmatprep.subr.mxu0 0.0
    %150 = vmatpush2.msra.mxu0 0.0
    %151 = vmatprep.subr.mxu0 0.0
    %152 = vmatpush2.msra.mxu0 0.0
    %153 = vmatprep.subr.mxu0 0.0
    %154 = vmatpush2.msra.mxu0 0.0
    %155 = vmatprep.subr.mxu0 0.0
    %156 = vmatpush2.msra.mxu0 0.0
    %157 = vmatprep.subr.mxu0 0.0
    %158 = vmatpush2.msra.mxu0 0.0
    %159 = vmatprep.subr.mxu0 0.0
    %160 = vmatpush2.msra.mxu0 0.0
    %161 = vmatprep.subr.mxu0 0.0
    %162 = vmatpush2.msra.mxu0 0.0
    %163 = vmatprep.subr.mxu0 0.0
    %164 = vmatpush2.msra.mxu0 0.0
    %165 = vmatprep.mubr.f32.mxu0 0.0
    %166 = vmatmul.mubr.f32.gmra.mxu0 %v70
    %v167 = vpop.f32.mrf.mxu0
    %v168 = vadd.f32 %v99, %v167
    %v169 = vpop.f32.mrf.mxu0
    %170 = vmatprep.mubr.f32.mxu0 0.0
    %171 = vmatmul.mubr.f32.gmra.mxu0 %v71
    %v172 = vpop.f32.mrf.mxu0
    %v173 = vadd.f32 %v99, %v172
    %v174 = vpop.f32.mrf.mxu0
    %175 = vmatprep.mubr.f32.mxu0 0.0
    %176 = vmatmul.mubr.f32.gmra.mxu0 %v72
    %v177 = vpop.f32.mrf.mxu0
    %v178 = vadd.f32 %v99, %v177
    %v179 = vpop.f32.mrf.mxu0
    %180 = vmatprep.mubr.f32.mxu0 0.0
    %181 = vmatmul.mubr.f32.gmra.mxu0 %v73
    %v182 = vpop.f32.mrf.mxu0
    %v183 = vadd.f32 %v99, %v182
    %v184 = vpop.f32.mrf.mxu0
    %185 = vmatprep.mubr.f32.mxu0 0.0
    %186 = vmatmul.mubr.f32.gmra.mxu0 %v74
    %v187 = vpop.f32.mrf.mxu0
    %v188 = vadd.f32 %v99, %v187
    %v189 = vpop.f32.mrf.mxu0
    %190 = vmatprep.mubr.f32.mxu0 0.0
    %191 = vmatmul.mubr.f32.gmra.mxu0 %v75
    %v192 = vpop.f32.mrf.mxu0
    %v193 = vadd.f32 %v99, %v192
    %v194 = vpop.f32.mrf.mxu0
    %195 = vmatprep.mubr.f32.mxu0 0.0
    %196 = vmatmul.mubr.f32.gmra.mxu0 %v76
    %v197 = vpop.f32.mrf.mxu0
    %v198 = vadd.f32 %v99, %v197
    %v199 = vpop.f32.mrf.mxu0
    %200 = vmatprep.mubr.f32.mxu0 0.0
    %201 = vmatmul.mubr.f32.gmra.mxu0 %v77
    %v202 = vpop.f32.mrf.mxu0
    %v203 = vadd.f32 %v99, %v202
    %v204 = vpop.f32.mrf.mxu0
    %205 = vdwg.mxu0
    %v206 = vmax.f32 %v168, 0.0
    %v207 = vmax.f32 %v173, 0.0
    %v208 = vmax.f32 %v178, 0.0
    %v209 = vmax.f32 %v183, 0.0
    %v210 = vmax.f32 %v188, 0.0
    %v211 = vmax.f32 %v193, 0.0
    %v212 = vmax.f32 %v198, 0.0
    %v213 = vmax.f32 %v203, 0.0
    %v214 = vld [vmem:[#allocation7] sm:$0xff]
    %v215 = vld [vmem:[#allocation7 + $0x8] sm:$0xff]
    %v216 = vld [vmem:[#allocation7 + $0x10] sm:$0xff]
    %v217 = vld [vmem:[#allocation7 + $0x18] sm:$0xff]
    %v218 = vld [vmem:[#allocation7 + $0x20] sm:$0xff]
    %v219 = vld [vmem:[#allocation7 + $0x28] sm:$0xff]
    %v220 = vld [vmem:[#allocation7 + $0x30] sm:$0xff]
    %v221 = vld [vmem:[#allocation7 + $0x38] sm:$0xff]
    %v222 = vld [vmem:[#allocation7 + $0x40] sm:$0xff]
    %v223 = vld [vmem:[#allocation7 + $0x48] sm:$0xff]
    %v224 = vld [vmem:[#allocation7 + $0x50] sm:$0xff]
    %v225 = vld [vmem:[#allocation7 + $0x58] sm:$0xff]
    %v226 = vld [vmem:[#allocation7 + $0x60] sm:$0xff]
    %v227 = vld [vmem:[#allocation7 + $0x68] sm:$0xff]
    %v228 = vld [vmem:[#allocation7 + $0x70] sm:$0xff]
    %v229 = vld [vmem:[#allocation7 + $0x78] sm:$0xff]
    %v230 = vld [vmem:[%s4] sm:$0x1]
    %v232 = vlaneseq
    %v233 = vshrl.u32 %v232, 7
    %v234 = vsub.s32 0, %v233
    %v235 = vrot.slane %v230, %v234
    %237 = vmatprep.subr.mxu0 0.0
    %238 = vmatpush1.msra.mxu0 %v229
    %239 = vmatprep.subr.mxu0 0.0
    %240 = vmatpush1.msra.mxu0 %v228
    %241 = vmatprep.subr.mxu0 0.0
    %242 = vmatpush1.msra.mxu0 %v227
    %243 = vmatprep.subr.mxu0 0.0
    %244 = vmatpush1.msra.mxu0 %v226
    %245 = vmatprep.subr.mxu0 0.0
    %246 = vmatpush1.msra.mxu0 %v225
    %247 = vmatprep.subr.mxu0 0.0
    %248 = vmatpush1.msra.mxu0 %v224
    %249 = vmatprep.subr.mxu0 0.0
    %250 = vmatpush1.msra.mxu0 %v223
    %251 = vmatprep.subr.mxu0 0.0
    %252 = vmatpush1.msra.mxu0 %v222
    %253 = vmatprep.subr.mxu0 0.0
    %254 = vmatpush1.msra.mxu0 %v221
    %255 = vmatprep.subr.mxu0 0.0
    %256 = vmatpush1.msra.mxu0 %v220
    %257 = vmatprep.subr.mxu0 0.0
    %258 = vmatpush1.msra.mxu0 %v219
    %259 = vmatprep.subr.mxu0 0.0
    %260 = vmatpush1.msra.mxu0 %v218
    %261 = vmatprep.subr.mxu0 0.0
    %262 = vmatpush1.msra.mxu0 %v217
    %263 = vmatprep.subr.mxu0 0.0
    %264 = vmatpush1.msra.mxu0 %v216
    %265 = vmatprep.subr.mxu0 0.0
    %266 = vmatpush1.msra.mxu0 %v215
    %267 = vmatprep.subr.mxu0 0.0
    %268 = vmatpush1.msra.mxu0 %v214
    %269 = vmatprep.subr.mxu0 0.0
    %270 = vmatpush2.msra.mxu0 0.0
    %271 = vmatprep.subr.mxu0 0.0
    %272 = vmatpush2.msra.mxu0 0.0
    %273 = vmatprep.subr.mxu0 0.0
    %274 = vmatpush2.msra.mxu0 0.0
    %275 = vmatprep.subr.mxu0 0.0
    %276 = vmatpush2.msra.mxu0 0.0
    %277 = vmatprep.subr.mxu0 0.0
    %278 = vmatpush2.msra.mxu0 0.0
    %279 = vmatprep.subr.mxu0 0.0
    %280 = vmatpush2.msra.mxu0 0.0
    %281 = vmatprep.subr.mxu0 0.0
    %282 = vmatpush2.msra.mxu0 0.0
    %283 = vmatprep.subr.mxu0 0.0
    %284 = vmatpush2.msra.mxu0 0.0
    %285 = vmatprep.subr.mxu0 0.0
    %286 = vmatpush2.msra.mxu0 0.0
    %287 = vmatprep.subr.mxu0 0.0
    %288 = vmatpush2.msra.mxu0 0.0
    %289 = vmatprep.subr.mxu0 0.0
    %290 = vmatpush2.msra.mxu0 0.0
    %291 = vmatprep.subr.mxu0 0.0
    %292 = vmatpush2.msra.mxu0 0.0
    %293 = vmatprep.subr.mxu0 0.0
    %294 = vmatpush2.msra.mxu0 0.0
    %295 = vmatprep.subr.mxu0 0.0
    %296 = vmatpush2.msra.mxu0 0.0
    %297 = vmatprep.subr.mxu0 0.0
    %298 = vmatpush2.msra.mxu0 0.0
    %299 = vmatprep.subr.mxu0 0.0
    %300 = vmatpush2.msra.mxu0 0.0
    %301 = vmatprep.mubr.f32.mxu0 0.0
    %302 = vmatmul.mubr.f32.gmra.mxu0 %v206
    %v303 = vpop.f32.mrf.mxu0
    %v304 = vadd.f32 %v235, %v303
    %v305 = vpop.f32.mrf.mxu0
    %306 = vmatprep.mubr.f32.mxu0 0.0
    %307 = vmatmul.mubr.f32.gmra.mxu0 %v207
    %v308 = vpop.f32.mrf.mxu0
    %v309 = vadd.f32 %v235, %v308
    %v310 = vpop.f32.mrf.mxu0
    %311 = vmatprep.mubr.f32.mxu0 0.0
    %312 = vmatmul.mubr.f32.gmra.mxu0 %v208
    %v313 = vpop.f32.mrf.mxu0
    %v314 = vadd.f32 %v235, %v313
    %v315 = vpop.f32.mrf.mxu0
    %316 = vmatprep.mubr.f32.mxu0 0.0
    %317 = vmatmul.mubr.f32.gmra.mxu0 %v209
    %v318 = vpop.f32.mrf.mxu0
    %v319 = vadd.f32 %v235, %v318
    %v320 = vpop.f32.mrf.mxu0
    %321 = vmatprep.mubr.f32.mxu0 0.0
    %322 = vmatmul.mubr.f32.gmra.mxu0 %v210
    %v323 = vpop.f32.mrf.mxu0
    %v324 = vadd.f32 %v235, %v323
    %v325 = vpop.f32.mrf.mxu0
    %326 = vmatprep.mubr.f32.mxu0 0.0
    %327 = vmatmul.mubr.f32.gmra.mxu0 %v211
    %v328 = vpop.f32.mrf.mxu0
    %v329 = vadd.f32 %v235, %v328
    %v330 = vpop.f32.mrf.mxu0
    %331 = vmatprep.mubr.f32.mxu0 0.0
    %332 = vmatmul.mubr.f32.gmra.mxu0 %v212
    %v333 = vpop.f32.mrf.mxu0
    %v334 = vadd.f32 %v235, %v333
    %v335 = vpop.f32.mrf.mxu0
    %336 = vmatprep.mubr.f32.mxu0 0.0
    %337 = vmatmul.mubr.f32.gmra.mxu0 %v213
    %v338 = vpop.f32.mrf.mxu0
    %v339 = vadd.f32 %v235, %v338
    %v340 = vpop.f32.mrf.mxu0
    %341 = vdwg.mxu0
    %v342 = vadd.f32 %v62, %v304
    %v343 = vadd.f32 %v63, %v309
    %v344 = vadd.f32 %v64, %v314
    %v345 = vadd.f32 %v65, %v319
    %v346 = vadd.f32 %v66, %v324
    %v347 = vadd.f32 %v67, %v329
    %v348 = vadd.f32 %v68, %v334
    %v349 = vadd.f32 %v69, %v339
    %v350 = vmax.f32 %v342, 0.0
    %v351 = vmax.f32 %v343, 0.0
    %v352 = vmax.f32 %v344, 0.0
    %v353 = vmax.f32 %v345, 0.0
    %v354 = vmax.f32 %v346, 0.0
    %v355 = vmax.f32 %v347, 0.0
    %v356 = vmax.f32 %v348, 0.0
    %v357 = vmax.f32 %v349, 0.0
    %s358 = scalar_lea.vmem [#allocation5], 128
    %v359 = vld [vmem:[%s358] sm:$0xff]
    %v360 = vld [vmem:[%s358 + $0x8] sm:$0xff]
    %v361 = vld [vmem:[%s358 + $0x10] sm:$0xff]
    %v362 = vld [vmem:[%s358 + $0x18] sm:$0xff]
    %v363 = vld [vmem:[%s358 + $0x20] sm:$0xff]
    %v364 = vld [vmem:[%s358 + $0x28] sm:$0xff]
    %v365 = vld [vmem:[%s358 + $0x30] sm:$0xff]
    %v366 = vld [vmem:[%s358 + $0x38] sm:$0xff]
    %v367 = vld [vmem:[%s358 + $0x40] sm:$0xff]
    %v368 = vld [vmem:[%s358 + $0x48] sm:$0xff]
    %v369 = vld [vmem:[%s358 + $0x50] sm:$0xff]
    %v370 = vld [vmem:[%s358 + $0x58] sm:$0xff]
    %v371 = vld [vmem:[%s358 + $0x60] sm:$0xff]
    %v372 = vld [vmem:[%s358 + $0x68] sm:$0xff]
    %v373 = vld [vmem:[%s358 + $0x70] sm:$0xff]
    %v374 = vld [vmem:[%s358 + $0x78] sm:$0xff]
    %s375 = scalar_lea.vmem %s2, 1
    %v376 = vld [vmem:[%s375] sm:$0x1]
    %v378 = vlaneseq
    %v379 = vshrl.u32 %v378, 7
    %v380 = vsub.s32 0, %v379
    %v381 = vrot.slane %v376, %v380
    %383 = vmatprep.subr.mxu0 0.0
    %384 = vmatpush1.msra.mxu0 %v374
    %385 = vmatprep.subr.mxu0 0.0
    %386 = vmatpush1.msra.mxu0 %v373
    %387 = vmatprep.subr.mxu0 0.0
    %388 = vmatpush1.msra.mxu0 %v372
    %389 = vmatprep.subr.mxu0 0.0
    %390 = vmatpush1.msra.mxu0 %v371
    %391 = vmatprep.subr.mxu0 0.0
    %392 = vmatpush1.msra.mxu0 %v370
    %393 = vmatprep.subr.mxu0 0.0
    %394 = vmatpush1.msra.mxu0 %v369
    %395 = vmatprep.subr.mxu0 0.0
    %396 = vmatpush1.msra.mxu0 %v368
    %397 = vmatprep.subr.mxu0 0.0
    %398 = vmatpush1.msra.mxu0 %v367
    %399 = vmatprep.subr.mxu0 0.0
    %400 = vmatpush1.msra.mxu0 %v366
    %401 = vmatprep.subr.mxu0 0.0
    %402 = vmatpush1.msra.mxu0 %v365
    %403 = vmatprep.subr.mxu0 0.0
    %404 = vmatpush1.msra.mxu0 %v364
    %405 = vmatprep.subr.mxu0 0.0
    %406 = vmatpush1.msra.mxu0 %v363
    %407 = vmatprep.subr.mxu0 0.0
    %408 = vmatpush1.msra.mxu0 %v362
    %409 = vmatprep.subr.mxu0 0.0
    %410 = vmatpush1.msra.mxu0 %v361
    %411 = vmatprep.subr.mxu0 0.0
    %412 = vmatpush1.msra.mxu0 %v360
    %413 = vmatprep.subr.mxu0 0.0
    %414 = vmatpush1.msra.mxu0 %v359
    %415 = vmatprep.subr.mxu0 0.0
    %416 = vmatpush2.msra.mxu0 0.0
    %417 = vmatprep.subr.mxu0 0.0
    %418 = vmatpush2.msra.mxu0 0.0
    %419 = vmatprep.subr.mxu0 0.0
    %420 = vmatpush2.msra.mxu0 0.0
    %421 = vmatprep.subr.mxu0 0.0
    %422 = vmatpush2.msra.mxu0 0.0
    %423 = vmatprep.subr.mxu0 0.0
    %424 = vmatpush2.msra.mxu0 0.0
    %425 = vmatprep.subr.mxu0 0.0
    %426 = vmatpush2.msra.mxu0 0.0
    %427 = vmatprep.subr.mxu0 0.0
    %428 = vmatpush2.msra.mxu0 0.0
    %429 = vmatprep.subr.mxu0 0.0
    %430 = vmatpush2.msra.mxu0 0.0
    %431 = vmatprep.subr.mxu0 0.0
    %432 = vmatpush2.msra.mxu0 0.0
    %433 = vmatprep.subr.mxu0 0.0
    %434 = vmatpush2.msra.mxu0 0.0
    %435 = vmatprep.subr.mxu0 0.0
    %436 = vmatpush2.msra.mxu0 0.0
    %437 = vmatprep.subr.mxu0 0.0
    %438 = vmatpush2.msra.mxu0 0.0
    %439 = vmatprep.subr.mxu0 0.0
    %440 = vmatpush2.msra.mxu0 0.0
    %441 = vmatprep.subr.mxu0 0.0
    %442 = vmatpush2.msra.mxu0 0.0
    %443 = vmatprep.subr.mxu0 0.0
    %444 = vmatpush2.msra.mxu0 0.0
    %445 = vmatprep.subr.mxu0 0.0
    %446 = vmatpush2.msra.mxu0 0.0
    %447 = vmatprep.mubr.f32.mxu0 0.0
    %448 = vmatmul.mubr.f32.gmra.mxu0 %v350
    %v449 = vpop.f32.mrf.mxu0
    %v450 = vadd.f32 %v381, %v449
    %v451 = vpop.f32.mrf.mxu0
    %452 = vmatprep.mubr.f32.mxu0 0.0
    %453 = vmatmul.mubr.f32.gmra.mxu0 %v351
    %v454 = vpop.f32.mrf.mxu0
    %v455 = vadd.f32 %v381, %v454
    %v456 = vpop.f32.mrf.mxu0
    %457 = vmatprep.mubr.f32.mxu0 0.0
    %458 = vmatmul.mubr.f32.gmra.mxu0 %v352
    %v459 = vpop.f32.mrf.mxu0
    %v460 = vadd.f32 %v381, %v459
    %v461 = vpop.f32.mrf.mxu0
    %462 = vmatprep.mubr.f32.mxu0 0.0
    %463 = vmatmul.mubr.f32.gmra.mxu0 %v353
    %v464 = vpop.f32.mrf.mxu0
    %v465 = vadd.f32 %v381, %v464
    %v466 = vpop.f32.mrf.mxu0
    %467 = vmatprep.mubr.f32.mxu0 0.0
    %468 = vmatmul.mubr.f32.gmra.mxu0 %v354
    %v469 = vpop.f32.mrf.mxu0
    %v470 = vadd.f32 %v381, %v469
    %v471 = vpop.f32.mrf.mxu0
    %472 = vmatprep.mubr.f32.mxu0 0.0
    %473 = vmatmul.mubr.f32.gmra.mxu0 %v355
    %v474 = vpop.f32.mrf.mxu0
    %v475 = vadd.f32 %v381, %v474
    %v476 = vpop.f32.mrf.mxu0
    %477 = vmatprep.mubr.f32.mxu0 0.0
    %478 = vmatmul.mubr.f32.gmra.mxu0 %v356
    %v479 = vpop.f32.mrf.mxu0
    %v480 = vadd.f32 %v381, %v479
    %v481 = vpop.f32.mrf.mxu0
    %482 = vmatprep.mubr.f32.mxu0 0.0
    %483 = vmatmul.mubr.f32.gmra.mxu0 %v357
    %v484 = vpop.f32.mrf.mxu0
    %v485 = vadd.f32 %v381, %v484
    %v486 = vpop.f32.mrf.mxu0
    %487 = vdwg.mxu0
    %v488 = vmax.f32 %v450, 0.0
    %v489 = vmax.f32 %v455, 0.0
    %v490 = vmax.f32 %v460, 0.0
    %v491 = vmax.f32 %v465, 0.0
    %v492 = vmax.f32 %v470, 0.0
    %v493 = vmax.f32 %v475, 0.0
    %v494 = vmax.f32 %v480, 0.0
    %v495 = vmax.f32 %v485, 0.0
    %s496 = scalar_lea.vmem [#allocation7], 128
    %v497 = vld [vmem:[%s496] sm:$0xff]
    %v498 = vld [vmem:[%s496 + $0x8] sm:$0xff]
    %v499 = vld [vmem:[%s496 + $0x10] sm:$0xff]
    %v500 = vld [vmem:[%s496 + $0x18] sm:$0xff]
    %v501 = vld [vmem:[%s496 + $0x20] sm:$0xff]
    %v502 = vld [vmem:[%s496 + $0x28] sm:$0xff]
    %v503 = vld [vmem:[%s496 + $0x30] sm:$0xff]
    %v504 = vld [vmem:[%s496 + $0x38] sm:$0xff]
    %v505 = vld [vmem:[%s496 + $0x40] sm:$0xff]
    %v506 = vld [vmem:[%s496 + $0x48] sm:$0xff]
    %v507 = vld [vmem:[%s496 + $0x50] sm:$0xff]
    %v508 = vld [vmem:[%s496 + $0x58] sm:$0xff]
    %v509 = vld [vmem:[%s496 + $0x60] sm:$0xff]
    %v510 = vld [vmem:[%s496 + $0x68] sm:$0xff]
    %v511 = vld [vmem:[%s496 + $0x70] sm:$0xff]
    %v512 = vld [vmem:[%s496 + $0x78] sm:$0xff]
    %s513 = scalar_lea.vmem %s4, 1
    %v514 = vld [vmem:[%s513] sm:$0x1]
    %v516 = vlaneseq
    %v517 = vshrl.u32 %v516, 7
    %v518 = vsub.s32 0, %v517
    %v519 = vrot.slane %v514, %v518
    %521 = vmatprep.subr.mxu0 0.0
    %522 = vmatpush1.msra.mxu0 %v512
    %523 = vmatprep.subr.mxu0 0.0
    %524 = vmatpush1.msra.mxu0 %v511
    %525 = vmatprep.subr.mxu0 0.0
    %526 = vmatpush1.msra.mxu0 %v510
    %527 = vmatprep.subr.mxu0 0.0
    %528 = vmatpush1.msra.mxu0 %v509
    %529 = vmatprep.subr.mxu0 0.0
    %530 = vmatpush1.msra.mxu0 %v508
    %531 = vmatprep.subr.mxu0 0.0
    %532 = vmatpush1.msra.mxu0 %v507
    %533 = vmatprep.subr.mxu0 0.0
    %534 = vmatpush1.msra.mxu0 %v506
    %535 = vmatprep.subr.mxu0 0.0
    %536 = vmatpush1.msra.mxu0 %v505
    %537 = vmatprep.subr.mxu0 0.0
    %538 = vmatpush1.msra.mxu0 %v504
    %539 = vmatprep.subr.mxu0 0.0
    %540 = vmatpush1.msra.mxu0 %v503
    %541 = vmatprep.subr.mxu0 0.0
    %542 = vmatpush1.msra.mxu0 %v502
    %543 = vmatprep.subr.mxu0 0.0
    %544 = vmatpush1.msra.mxu0 %v501
    %545 = vmatprep.subr.mxu0 0.0
    %546 = vmatpush1.msra.mxu0 %v500
    %547 = vmatprep.subr.mxu0 0.0
    %548 = vmatpush1.msra.mxu0 %v499
    %549 = vmatprep.subr.mxu0 0.0
    %550 = vmatpush1.msra.mxu0 %v498
    %551 = vmatprep.subr.mxu0 0.0
    %552 = vmatpush1.msra.mxu0 %v497
    %553 = vmatprep.subr.mxu0 0.0
    %554 = vmatpush2.msra.mxu0 0.0
    %555 = vmatprep.subr.mxu0 0.0
    %556 = vmatpush2.msra.mxu0 0.0
    %557 = vmatprep.subr.mxu0 0.0
    %558 = vmatpush2.msra.mxu0 0.0
    %559 = vmatprep.subr.mxu0 0.0
    %560 = vmatpush2.msra.mxu0 0.0
    %561 = vmatprep.subr.mxu0 0.0
    %562 = vmatpush2.msra.mxu0 0.0
    %563 = vmatprep.subr.mxu0 0.0
    %564 = vmatpush2.msra.mxu0 0.0
    %565 = vmatprep.subr.mxu0 0.0
    %566 = vmatpush2.msra.mxu0 0.0
    %567 = vmatprep.subr.mxu0 0.0
    %568 = vmatpush2.msra.mxu0 0.0
    %569 = vmatprep.subr.mxu0 0.0
    %570 = vmatpush2.msra.mxu0 0.0
    %571 = vmatprep.subr.mxu0 0.0
    %572 = vmatpush2.msra.mxu0 0.0
    %573 = vmatprep.subr.mxu0 0.0
    %574 = vmatpush2.msra.mxu0 0.0
    %575 = vmatprep.subr.mxu0 0.0
    %576 = vmatpush2.msra.mxu0 0.0
    %577 = vmatprep.subr.mxu0 0.0
    %578 = vmatpush2.msra.mxu0 0.0
    %579 = vmatprep.subr.mxu0 0.0
    %580 = vmatpush2.msra.mxu0 0.0
    %581 = vmatprep.subr.mxu0 0.0
    %582 = vmatpush2.msra.mxu0 0.0
    %583 = vmatprep.subr.mxu0 0.0
    %584 = vmatpush2.msra.mxu0 0.0
    %585 = vmatprep.mubr.f32.mxu0 0.0
    %586 = vmatmul.mubr.f32.gmra.mxu0 %v488
    %v587 = vpop.f32.mrf.mxu0
    %v588 = vadd.f32 %v519, %v587
    %v589 = vpop.f32.mrf.mxu0
    %590 = vmatprep.mubr.f32.mxu0 0.0
    %591 = vmatmul.mubr.f32.gmra.mxu0 %v489
    %v592 = vpop.f32.mrf.mxu0
    %v593 = vadd.f32 %v519, %v592
    %v594 = vpop.f32.mrf.mxu0
    %595 = vmatprep.mubr.f32.mxu0 0.0
    %596 = vmatmul.mubr.f32.gmra.mxu0 %v490
    %v597 = vpop.f32.mrf.mxu0
    %v598 = vadd.f32 %v519, %v597
    %v599 = vpop.f32.mrf.mxu0
    %600 = vmatprep.mubr.f32.mxu0 0.0
    %601 = vmatmul.mubr.f32.gmra.mxu0 %v491
    %v602 = vpop.f32.mrf.mxu0
    %v603 = vadd.f32 %v519, %v602
    %v604 = vpop.f32.mrf.mxu0
    %605 = vmatprep.mubr.f32.mxu0 0.0
    %606 = vmatmul.mubr.f32.gmra.mxu0 %v492
    %v607 = vpop.f32.mrf.mxu0
    %v608 = vadd.f32 %v519, %v607
    %v609 = vpop.f32.mrf.mxu0
    %610 = vmatprep.mubr.f32.mxu0 0.0
    %611 = vmatmul.mubr.f32.gmra.mxu0 %v493
    %v612 = vpop.f32.mrf.mxu0
    %v613 = vadd.f32 %v519, %v612
    %v614 = vpop.f32.mrf.mxu0
    %615 = vmatprep.mubr.f32.mxu0 0.0
    %616 = vmatmul.mubr.f32.gmra.mxu0 %v494
    %v617 = vpop.f32.mrf.mxu0
    %v618 = vadd.f32 %v519, %v617
    %v619 = vpop.f32.mrf.mxu0
    %620 = vmatprep.mubr.f32.mxu0 0.0
    %621 = vmatmul.mubr.f32.gmra.mxu0 %v495
    %v622 = vpop.f32.mrf.mxu0
    %v623 = vadd.f32 %v519, %v622
    %v624 = vpop.f32.mrf.mxu0
    %625 = vdwg.mxu0
    %v626 = vadd.f32 %v342, %v588
    %v627 = vadd.f32 %v343, %v593
    %v628 = vadd.f32 %v344, %v598
    %v629 = vadd.f32 %v345, %v603
    %v630 = vadd.f32 %v346, %v608
    %v631 = vadd.f32 %v347, %v613
    %v632 = vadd.f32 %v348, %v618
    %v633 = vadd.f32 %v349, %v623
    %v634 = vmax.f32 %v626, 0.0
    %v635 = vmax.f32 %v627, 0.0
    %v636 = vmax.f32 %v628, 0.0
    %v637 = vmax.f32 %v629, 0.0
    %v638 = vmax.f32 %v630, 0.0
    %v639 = vmax.f32 %v631, 0.0
    %v640 = vmax.f32 %v632, 0.0
    %v641 = vmax.f32 %v633, 0.0
    %s642 = scalar_lea.vmem [#allocation5], 256
    %v643 = vld [vmem:[%s642] sm:$0xff]
    %v644 = vld [vmem:[%s642 + $0x8] sm:$0xff]
    %v645 = vld [vmem:[%s642 + $0x10] sm:$0xff]
    %v646 = vld [vmem:[%s642 + $0x18] sm:$0xff]
    %v647 = vld [vmem:[%s642 + $0x20] sm:$0xff]
    %v648 = vld [vmem:[%s642 + $0x28] sm:$0xff]
    %v649 = vld [vmem:[%s642 + $0x30] sm:$0xff]
    %v650 = vld [vmem:[%s642 + $0x38] sm:$0xff]
    %v651 = vld [vmem:[%s642 + $0x40] sm:$0xff]
    %v652 = vld [vmem:[%s642 + $0x48] sm:$0xff]
    %v653 = vld [vmem:[%s642 + $0x50] sm:$0xff]
    %v654 = vld [vmem:[%s642 + $0x58] sm:$0xff]
    %v655 = vld [vmem:[%s642 + $0x60] sm:$0xff]
    %v656 = vld [vmem:[%s642 + $0x68] sm:$0xff]
    %v657 = vld [vmem:[%s642 + $0x70] sm:$0xff]
    %v658 = vld [vmem:[%s642 + $0x78] sm:$0xff]
    %s659 = scalar_lea.vmem %s2, 2
    %v660 = vld [vmem:[%s659] sm:$0x1]
    %v662 = vlaneseq
    %v663 = vshrl.u32 %v662, 7
    %v664 = vsub.s32 0, %v663
    %v665 = vrot.slane %v660, %v664
    %667 = vmatprep.subr.mxu0 0.0
    %668 = vmatpush1.msra.mxu0 %v658
    %669 = vmatprep.subr.mxu0 0.0
    %670 = vmatpush1.msra.mxu0 %v657
    %671 = vmatprep.subr.mxu0 0.0
    %672 = vmatpush1.msra.mxu0 %v656
    %673 = vmatprep.subr.mxu0 0.0
    %674 = vmatpush1.msra.mxu0 %v655
    %675 = vmatprep.subr.mxu0 0.0
    %676 = vmatpush1.msra.mxu0 %v654
    %677 = vmatprep.subr.mxu0 0.0
    %678 = vmatpush1.msra.mxu0 %v653
    %679 = vmatprep.subr.mxu0 0.0
    %680 = vmatpush1.msra.mxu0 %v652
    %681 = vmatprep.subr.mxu0 0.0
    %682 = vmatpush1.msra.mxu0 %v651
    %683 = vmatprep.subr.mxu0 0.0
    %684 = vmatpush1.msra.mxu0 %v650
    %685 = vmatprep.subr.mxu0 0.0
    %686 = vmatpush1.msra.mxu0 %v649
    %687 = vmatprep.subr.mxu0 0.0
    %688 = vmatpush1.msra.mxu0 %v648
    %689 = vmatprep.subr.mxu0 0.0
    %690 = vmatpush1.msra.mxu0 %v647
    %691 = vmatprep.subr.mxu0 0.0
    %692 = vmatpush1.msra.mxu0 %v646
    %693 = vmatprep.subr.mxu0 0.0
    %694 = vmatpush1.msra.mxu0 %v645
    %695 = vmatprep.subr.mxu0 0.0
    %696 = vmatpush1.msra.mxu0 %v644
    %697 = vmatprep.subr.mxu0 0.0
    %698 = vmatpush1.msra.mxu0 %v643
    %699 = vmatprep.subr.mxu0 0.0
    %700 = vmatpush2.msra.mxu0 0.0
    %701 = vmatprep.subr.mxu0 0.0
    %702 = vmatpush2.msra.mxu0 0.0
    %703 = vmatprep.subr.mxu0 0.0
    %704 = vmatpush2.msra.mxu0 0.0
    %705 = vmatprep.subr.mxu0 0.0
    %706 = vmatpush2.msra.mxu0 0.0
    %707 = vmatprep.subr.mxu0 0.0
    %708 = vmatpush2.msra.mxu0 0.0
    %709 = vmatprep.subr.mxu0 0.0
    %710 = vmatpush2.msra.mxu0 0.0
    %711 = vmatprep.subr.mxu0 0.0
    %712 = vmatpush2.msra.mxu0 0.0
    %713 = vmatprep.subr.mxu0 0.0
    %714 = vmatpush2.msra.mxu0 0.0
    %715 = vmatprep.subr.mxu0 0.0
    %716 = vmatpush2.msra.mxu0 0.0
    %717 = vmatprep.subr.mxu0 0.0
    %718 = vmatpush2.msra.mxu0 0.0
    %719 = vmatprep.subr.mxu0 0.0
    %720 = vmatpush2.msra.mxu0 0.0
    %721 = vmatprep.subr.mxu0 0.0
    %722 = vmatpush2.msra.mxu0 0.0
    %723 = vmatprep.subr.mxu0 0.0
    %724 = vmatpush2.msra.mxu0 0.0
    %725 = vmatprep.subr.mxu0 0.0
    %726 = vmatpush2.msra.mxu0 0.0
    %727 = vmatprep.subr.mxu0 0.0
    %728 = vmatpush2.msra.mxu0 0.0
    %729 = vmatprep.subr.mxu0 0.0
    %730 = vmatpush2.msra.mxu0 0.0
    %731 = vmatprep.mubr.f32.mxu0 0.0
    %732 = vmatmul.mubr.f32.gmra.mxu0 %v634
    %v733 = vpop.f32.mrf.mxu0
    %v734 = vadd.f32 %v665, %v733
    %v735 = vpop.f32.mrf.mxu0
    %736 = vmatprep.mubr.f32.mxu0 0.0
    %737 = vmatmul.mubr.f32.gmra.mxu0 %v635
    %v738 = vpop.f32.mrf.mxu0
    %v739 = vadd.f32 %v665, %v738
    %v740 = vpop.f32.mrf.mxu0
    %741 = vmatprep.mubr.f32.mxu0 0.0
    %742 = vmatmul.mubr.f32.gmra.mxu0 %v636
    %v743 = vpop.f32.mrf.mxu0
    %v744 = vadd.f32 %v665, %v743
    %v745 = vpop.f32.mrf.mxu0
    %746 = vmatprep.mubr.f32.mxu0 0.0
    %747 = vmatmul.mubr.f32.gmra.mxu0 %v637
    %v748 = vpop.f32.mrf.mxu0
    %v749 = vadd.f32 %v665, %v748
    %v750 = vpop.f32.mrf.mxu0
    %751 = vmatprep.mubr.f32.mxu0 0.0
    %752 = vmatmul.mubr.f32.gmra.mxu0 %v638
    %v753 = vpop.f32.mrf.mxu0
    %v754 = vadd.f32 %v665, %v753
    %v755 = vpop.f32.mrf.mxu0
    %756 = vmatprep.mubr.f32.mxu0 0.0
    %757 = vmatmul.mubr.f32.gmra.mxu0 %v639
    %v758 = vpop.f32.mrf.mxu0
    %v759 = vadd.f32 %v665, %v758
    %v760 = vpop.f32.mrf.mxu0
    %761 = vmatprep.mubr.f32.mxu0 0.0
    %762 = vmatmul.mubr.f32.gmra.mxu0 %v640
    %v763 = vpop.f32.mrf.mxu0
    %v764 = vadd.f32 %v665, %v763
    %v765 = vpop.f32.mrf.mxu0
    %766 = vmatprep.mubr.f32.mxu0 0.0
    %767 = vmatmul.mubr.f32.gmra.mxu0 %v641
    %v768 = vpop.f32.mrf.mxu0
    %v769 = vadd.f32 %v665, %v768
    %v770 = vpop.f32.mrf.mxu0
    %771 = vdwg.mxu0
    %v772 = vmax.f32 %v734, 0.0
    %v773 = vmax.f32 %v739, 0.0
    %v774 = vmax.f32 %v744, 0.0
    %v775 = vmax.f32 %v749, 0.0
    %v776 = vmax.f32 %v754, 0.0
    %v777 = vmax.f32 %v759, 0.0
    %v778 = vmax.f32 %v764, 0.0
    %v779 = vmax.f32 %v769, 0.0
    %s780 = scalar_lea.vmem [#allocation7], 256
    %v781 = vld [vmem:[%s780] sm:$0xff]
    %v782 = vld [vmem:[%s780 + $0x8] sm:$0xff]
    %v783 = vld [vmem:[%s780 + $0x10] sm:$0xff]
    %v784 = vld [vmem:[%s780 + $0x18] sm:$0xff]
    %v785 = vld [vmem:[%s780 + $0x20] sm:$0xff]
    %v786 = vld [vmem:[%s780 + $0x28] sm:$0xff]
    %v787 = vld [vmem:[%s780 + $0x30] sm:$0xff]
    %v788 = vld [vmem:[%s780 + $0x38] sm:$0xff]
    %v789 = vld [vmem:[%s780 + $0x40] sm:$0xff]
    %v790 = vld [vmem:[%s780 + $0x48] sm:$0xff]
    %v791 = vld [vmem:[%s780 + $0x50] sm:$0xff]
    %v792 = vld [vmem:[%s780 + $0x58] sm:$0xff]
    %v793 = vld [vmem:[%s780 + $0x60] sm:$0xff]
    %v794 = vld [vmem:[%s780 + $0x68] sm:$0xff]
    %v795 = vld [vmem:[%s780 + $0x70] sm:$0xff]
    %v796 = vld [vmem:[%s780 + $0x78] sm:$0xff]
    %s797 = scalar_lea.vmem %s4, 2
    %v798 = vld [vmem:[%s797] sm:$0x1]
    %v800 = vlaneseq
    %v801 = vshrl.u32 %v800, 7
    %v802 = vsub.s32 0, %v801
    %v803 = vrot.slane %v798, %v802
    %805 = vmatprep.subr.mxu0 0.0
    %806 = vmatpush1.msra.mxu0 %v796
    %807 = vmatprep.subr.mxu0 0.0
    %808 = vmatpush1.msra.mxu0 %v795
    %809 = vmatprep.subr.mxu0 0.0
    %810 = vmatpush1.msra.mxu0 %v794
    %811 = vmatprep.subr.mxu0 0.0
    %812 = vmatpush1.msra.mxu0 %v793
    %813 = vmatprep.subr.mxu0 0.0
    %814 = vmatpush1.msra.mxu0 %v792
    %815 = vmatprep.subr.mxu0 0.0
    %816 = vmatpush1.msra.mxu0 %v791
    %817 = vmatprep.subr.mxu0 0.0
    %818 = vmatpush1.msra.mxu0 %v790
    %819 = vmatprep.subr.mxu0 0.0
    %820 = vmatpush1.msra.mxu0 %v789
    %821 = vmatprep.subr.mxu0 0.0
    %822 = vmatpush1.msra.mxu0 %v788
    %823 = vmatprep.subr.mxu0 0.0
    %824 = vmatpush1.msra.mxu0 %v787
    %825 = vmatprep.subr.mxu0 0.0
    %826 = vmatpush1.msra.mxu0 %v786
    %827 = vmatprep.subr.mxu0 0.0
    %828 = vmatpush1.msra.mxu0 %v785
    %829 = vmatprep.subr.mxu0 0.0
    %830 = vmatpush1.msra.mxu0 %v784
    %831 = vmatprep.subr.mxu0 0.0
    %832 = vmatpush1.msra.mxu0 %v783
    %833 = vmatprep.subr.mxu0 0.0
    %834 = vmatpush1.msra.mxu0 %v782
    %835 = vmatprep.subr.mxu0 0.0
    %836 = vmatpush1.msra.mxu0 %v781
    %837 = vmatprep.subr.mxu0 0.0
    %838 = vmatpush2.msra.mxu0 0.0
    %839 = vmatprep.subr.mxu0 0.0
    %840 = vmatpush2.msra.mxu0 0.0
    %841 = vmatprep.subr.mxu0 0.0
    %842 = vmatpush2.msra.mxu0 0.0
    %843 = vmatprep.subr.mxu0 0.0
    %844 = vmatpush2.msra.mxu0 0.0
    %845 = vmatprep.subr.mxu0 0.0
    %846 = vmatpush2.msra.mxu0 0.0
    %847 = vmatprep.subr.mxu0 0.0
    %848 = vmatpush2.msra.mxu0 0.0
    %849 = vmatprep.subr.mxu0 0.0
    %850 = vmatpush2.msra.mxu0 0.0
    %851 = vmatprep.subr.mxu0 0.0
    %852 = vmatpush2.msra.mxu0 0.0
    %853 = vmatprep.subr.mxu0 0.0
    %854 = vmatpush2.msra.mxu0 0.0
    %855 = vmatprep.subr.mxu0 0.0
    %856 = vmatpush2.msra.mxu0 0.0
    %857 = vmatprep.subr.mxu0 0.0
    %858 = vmatpush2.msra.mxu0 0.0
    %859 = vmatprep.subr.mxu0 0.0
    %860 = vmatpush2.msra.mxu0 0.0
    %861 = vmatprep.subr.mxu0 0.0
    %862 = vmatpush2.msra.mxu0 0.0
    %863 = vmatprep.subr.mxu0 0.0
    %864 = vmatpush2.msra.mxu0 0.0
    %865 = vmatprep.subr.mxu0 0.0
    %866 = vmatpush2.msra.mxu0 0.0
    %867 = vmatprep.subr.mxu0 0.0
    %868 = vmatpush2.msra.mxu0 0.0
    %869 = vmatprep.mubr.f32.mxu0 0.0
    %870 = vmatmul.mubr.f32.gmra.mxu0 %v772
    %v871 = vpop.f32.mrf.mxu0
    %v872 = vadd.f32 %v803, %v871
    %v873 = vpop.f32.mrf.mxu0
    %874 = vmatprep.mubr.f32.mxu0 0.0
    %875 = vmatmul.mubr.f32.gmra.mxu0 %v773
    %v876 = vpop.f32.mrf.mxu0
    %v877 = vadd.f32 %v803, %v876
    %v878 = vpop.f32.mrf.mxu0
    %879 = vmatprep.mubr.f32.mxu0 0.0
    %880 = vmatmul.mubr.f32.gmra.mxu0 %v774
    %v881 = vpop.f32.mrf.mxu0
    %v882 = vadd.f32 %v803, %v881
    %v883 = vpop.f32.mrf.mxu0
    %884 = vmatprep.mubr.f32.mxu0 0.0
    %885 = vmatmul.mubr.f32.gmra.mxu0 %v775
    %v886 = vpop.f32.mrf.mxu0
    %v887 = vadd.f32 %v803, %v886
    %v888 = vpop.f32.mrf.mxu0
    %889 = vmatprep.mubr.f32.mxu0 0.0
    %890 = vmatmul.mubr.f32.gmra.mxu0 %v776
    %v891 = vpop.f32.mrf.mxu0
    %v892 = vadd.f32 %v803, %v891
    %v893 = vpop.f32.mrf.mxu0
    %894 = vmatprep.mubr.f32.mxu0 0.0
    %895 = vmatmul.mubr.f32.gmra.mxu0 %v777
    %v896 = vpop.f32.mrf.mxu0
    %v897 = vadd.f32 %v803, %v896
    %v898 = vpop.f32.mrf.mxu0
    %899 = vmatprep.mubr.f32.mxu0 0.0
    %900 = vmatmul.mubr.f32.gmra.mxu0 %v778
    %v901 = vpop.f32.mrf.mxu0
    %v902 = vadd.f32 %v803, %v901
    %v903 = vpop.f32.mrf.mxu0
    %904 = vmatprep.mubr.f32.mxu0 0.0
    %905 = vmatmul.mubr.f32.gmra.mxu0 %v779
    %v906 = vpop.f32.mrf.mxu0
    %v907 = vadd.f32 %v803, %v906
    %v908 = vpop.f32.mrf.mxu0
    %909 = vdwg.mxu0
    %v910 = vadd.f32 %v626, %v872
    %v911 = vadd.f32 %v627, %v877
    %v912 = vadd.f32 %v628, %v882
    %v913 = vadd.f32 %v629, %v887
    %v914 = vadd.f32 %v630, %v892
    %v915 = vadd.f32 %v631, %v897
    %v916 = vadd.f32 %v632, %v902
    %v917 = vadd.f32 %v633, %v907
    %918 = vst [vmem:[#allocation8] sm:$0xff] %v910
    %919 = vst [vmem:[#allocation8 + $0x8] sm:$0xff] %v911
    %920 = vst [vmem:[#allocation8 + $0x10] sm:$0xff] %v912
    %921 = vst [vmem:[#allocation8 + $0x18] sm:$0xff] %v913
    %922 = vst [vmem:[#allocation8 + $0x20] sm:$0xff] %v914
    %923 = vst [vmem:[#allocation8 + $0x28] sm:$0xff] %v915
    %924 = vst [vmem:[#allocation8 + $0x30] sm:$0xff] %v916
    %925 = vst [vmem:[#allocation8 + $0x38] sm:$0xff] %v917
    // Predicated region
    $region34: #{tpu_custom_call.1} parent=1 // pred_check
      _
    $region35: #{tpu_custom_call.1} parent=1 // pred_check_branch
      %927 = sbr.rel (0) target = $region37
    $region36: #{tpu_custom_call.1} parent=1 // pred_region
      %s929 = ssub.s32 1024, 1024
      %930 = vsyncadd [#allocation4], %s929
      %s931 = sshll.u32 [#allocation8], 4
      %s932 = int_to_ptr.vmem [resolvable:$true] %s931
      %937 = dma.vmem_to_hbm [thread:$0]  %s932, 1024, %s5, [#allocation4], 128, 128, 8
    $region37: #{tpu_custom_call.1} parent=1 // pred_fallthru
      _
    // Predicated region
    $region38: #{tpu_custom_call.1} parent=1 // pred_check
      _
    $region39: #{tpu_custom_call.1} parent=1 // pred_check_branch
      %939 = sbr.rel (0) target = $region41
    $region40: #{tpu_custom_call.1} parent=1 // pred_region
      %940 = dma.done [#allocation4], 1024
    $region41: #{tpu_custom_call.1} parent=1 // pred_fallthru
      _
    %941 = vsyncpa [#allocation3], 1
    %942 = vsyncpa [#allocation6], 1
    %943 = vsyncpa [#allocation4], 1

</llo_original>
